<compile_context>
chip_gen: v7x
topology: tpu7x:2x2x1
jax: 0.10.0
libtpu: 0.0.40
codegen_flags: <defaults>
</compile_context>

<pallas_src>
import jax
import jax.numpy as jnp
from jax.experimental import pallas as pl
from jax.experimental.pallas import tpu as pltpu


def _text_actor_kernel(counts_ref, sel_ref, unsel_ref, tweet_ref,
                       w1_ref, b1_ref, w2_ref, b2_ref, out_ref):
    e = tweet_ref.shape[1]
    bt = tweet_ref.shape[0]
    max_pool = sel_ref.shape[0]

    # Masked means over the fixed-size pools (rows >= count are zero padding,
    # but mask anyway so the buffer contents past `count` never matter).
    n_sel = jnp.maximum(counts_ref[0], 1)
    n_uns = jnp.maximum(counts_ref[1], 1)
    row_ids = jax.lax.broadcasted_iota(jnp.int32, (max_pool, e), 0)
    sel_sum = jnp.sum(jnp.where(row_ids < n_sel, sel_ref[...], 0.0),
                      axis=0, keepdims=True)                          # [1, E]
    uns_sum = jnp.sum(jnp.where(row_ids < n_uns, unsel_ref[...], 0.0),
                      axis=0, keepdims=True)                          # [1, E]
    state_a = sel_sum * (1.0 / n_sel.astype(jnp.float32))             # [1, E]
    state_b = uns_sum * (1.0 / n_uns.astype(jnp.float32))             # [1, E]

    tweet = tweet_ref[...]                                            # [BT, E]

    # First Linear as three partial dots (no [BT, 3E] concat at non-aligned
    # lane offsets); f32 accumulation on the MXU.
    h = jnp.dot(tweet, w1_ref[2 * e:3 * e, :],
                preferred_element_type=jnp.float32)                   # [BT, E]
    h = h + jnp.dot(state_a, w1_ref[0:e, :],
                    preferred_element_type=jnp.float32)               # bcast [1,E]
    h = h + jnp.dot(state_b, w1_ref[e:2 * e, :],
                    preferred_element_type=jnp.float32)
    h = jnp.maximum(h + b1_ref[...], 0.0)                             # ReLU

    logits = jnp.dot(h, w2_ref[...],
                     preferred_element_type=jnp.float32) + b2_ref[...]  # [BT, 2]

    # 2-class softmax; approximate reciprocal runs on the EUP slot.
    m = jnp.max(logits, axis=-1, keepdims=True)
    ex = jnp.exp(logits - m)
    probs = ex * pl.reciprocal(jnp.sum(ex, axis=-1, keepdims=True), approx=True)

    # Single lane-dense output slab: [ state_a | state_b | tweet | probs | 0 ].
    out_ref[...] = jnp.zeros_like(out_ref)
    out_ref[:, 0:e] = jnp.broadcast_to(state_a, (bt, e))
    out_ref[:, e:2 * e] = jnp.broadcast_to(state_b, (bt, e))
    out_ref[:, 2 * e:3 * e] = tweet
    out_ref[:, 3 * e:3 * e + 2] = probs


def _round_up(x, m):
    return ((x + m - 1) // m) * m


@jax.jit
def text_actor_forward(selected_buf, unselected_buf, counts, tweet,
                       w1, b1, w2, b2):
    """TextActor.forward hot path (greedy / need_backward=False branch).

    selected_buf / unselected_buf: [MAX_POOL, E] f32, zero-padded past counts
    counts: [2] int32 = (#valid selected rows, #valid unselected rows)
    tweet:  [B, E] f32   (B == 1 in the original module)
    w1: [3E, E], b1: [1, E], w2: [E, 2], b2: [1, 2]
    Returns (state [B, 3E], probs [B, 2], action [B, 1] int32).
    """
    b, e = tweet.shape
    bt = 8                                      # sublane-aligned batch tile
    bpad = _round_up(b, bt)
    out_w = _round_up(3 * e + 2, 128)           # lane-dense output width

    tweet_pad = tweet
    if bpad != b:
        tweet_pad = jnp.zeros((bpad, e), tweet.dtype).at[:b].set(tweet)

    grid_spec = pltpu.PrefetchScalarGridSpec(
        num_scalar_prefetch=1,                  # counts -> SMEM
        grid=(bpad // bt,),
        in_specs=[
            pl.BlockSpec(selected_buf.shape, lambda i, c: (0, 0)),
            pl.BlockSpec(unselected_buf.shape, lambda i, c: (0, 0)),
            pl.BlockSpec((bt, e), lambda i, c: (i, 0)),
            pl.BlockSpec(w1.shape, lambda i, c: (0, 0)),
            pl.BlockSpec(b1.shape, lambda i, c: (0, 0)),
            pl.BlockSpec(w2.shape, lambda i, c: (0, 0)),
            pl.BlockSpec(b2.shape, lambda i, c: (0, 0)),
        ],
        out_specs=pl.BlockSpec((bt, out_w), lambda i, c: (i, 0)),
    )

    slab = pl.pallas_call(
        _text_actor_kernel,
        out_shape=jax.ShapeDtypeStruct((bpad, out_w), jnp.float32),
        grid_spec=grid_spec,
        compiler_params=pltpu.CompilerParams(
            dimension_semantics=("parallel",)),   # shards batch tiles on v7x
    )(counts, selected_buf, unselected_buf, tweet_pad, w1, b1, w2, b2)

    state = slab[:b, 0:3 * e]
    probs = slab[:b, 3 * e:3 * e + 2]
    # argmax in the wrapper (one compare in XLA); softmax is monotone, so this
    # matches torch.max(probs, 1)[1] (greedy branch of choose_action).
    action = jnp.argmax(probs, axis=-1, keepdims=True).astype(jnp.int32)
    return state, probs, action


def _reference(selected, unselected, tweet, w1, b1, w2, b2):
    state_a = jnp.mean(selected, axis=0, keepdims=True)
    state_b = jnp.mean(unselected, axis=0, keepdims=True)
    state = jnp.concatenate(
        [jnp.broadcast_to(state_a, tweet.shape),
         jnp.broadcast_to(state_b, tweet.shape),
         tweet], axis=-1)
    h = jnp.maximum(state @ w1 + b1, 0.0)
    logits = h @ w2 + b2
    probs = jax.nn.softmax(logits, axis=-1)
    action = jnp.argmax(probs, axis=-1, keepdims=True).astype(jnp.int32)
    return state, probs, action


if __name__ == "__main__":
    encoding_dim = 32   # nn.Linear(3*E, E) -> (E, 2)
    batch = 1           # TextActor processes a single tweet row per forward
    max_pool = 64       # fixed pool capacity (no per-step recompilation)
    n_selected = 3      # valid rows in selected pool (incl. BaseActor zeros row)
    n_unselected = 2    # valid rows in unselected pool

    key = jax.random.PRNGKey(0)
    k_sel, k_uns, k_tw, k_w1, k_b1, k_w2, k_b2 = jax.random.split(key, 7)

    # Fixed-size pool buffers: row 0 is the zeros row from BaseActor.__init__,
    # rows [1, count) are previously appended tweets, rest is zero padding.
    selected_buf = jnp.zeros((max_pool, encoding_dim), jnp.float32)
    selected_buf = selected_buf.at[1:n_selected].set(
        jax.random.normal(k_sel, (n_selected - 1, encoding_dim), jnp.float32))
    unselected_buf = jnp.zeros((max_pool, encoding_dim), jnp.float32)
    unselected_buf = unselected_buf.at[1:n_unselected].set(
        jax.random.normal(k_uns, (n_unselected - 1, encoding_dim), jnp.float32))
    counts = jnp.array([n_selected, n_unselected], jnp.int32)

    tweet = jax.random.normal(k_tw, (batch, encoding_dim), jnp.float32)

    # Deterministic synthetic parameters (shapes from nn.Linear(3E, E), (E, 2)).
    bound1 = 1.0 / jnp.sqrt(3.0 * encoding_dim)
    bound2 = 1.0 / jnp.sqrt(1.0 * encoding_dim)
    w1 = jax.random.uniform(k_w1, (3 * encoding_dim, encoding_dim),
                            jnp.float32, -bound1, bound1)
    b1 = jax.random.uniform(k_b1, (1, encoding_dim), jnp.float32, -bound1, bound1)
    w2 = jax.random.uniform(k_w2, (encoding_dim, 2), jnp.float32, -bound2, bound2)
    b2 = jax.random.uniform(k_b2, (1, 2), jnp.float32, -bound2, bound2)

    state, probs, action = text_actor_forward(
        selected_buf, unselected_buf, counts, tweet, w1, b1, w2, b2)
    jax.block_until_ready((state, probs, action))

    ref_state, ref_probs, ref_action = _reference(
        selected_buf[:n_selected], unselected_buf[:n_unselected],
        tweet, w1, b1, w2, b2)
    assert jnp.allclose(state, ref_state, atol=1e-5, rtol=1e-5)
    assert jnp.allclose(probs, ref_probs, atol=2e-3, rtol=2e-3)  # approx recip
    assert jnp.array_equal(action, ref_action)

    print("KERNEL_OK")
</pallas_src>

<mosaic_0001>
module attributes {stable_mosaic.version = 11 : i64} {
  func.func @_text_actor_kernel(%arg0: i32, %arg1: memref<2xi32, #tpu.memory_space<smem>>, %arg2: memref<64x32xf32, #tpu.memory_space<vmem>>, %arg3: memref<64x32xf32, #tpu.memory_space<vmem>>, %arg4: memref<8x32xf32, #tpu.memory_space<vmem>>, %arg5: memref<96x32xf32, #tpu.memory_space<vmem>>, %arg6: memref<1x32xf32, #tpu.memory_space<vmem>>, %arg7: memref<32x2xf32, #tpu.memory_space<vmem>>, %arg8: memref<1x2xf32, #tpu.memory_space<vmem>>, %arg9: memref<8x128xf32, #tpu.memory_space<vmem>>) attributes {dimension_semantics = [#tpu.dimension_semantics<parallel>], iteration_bounds = array<i64: 1>, scalar_prefetch = 1 : i64, scratch_operands = 0 : i64, tpu.core_type = #tpu.core_type<tc>, window_params = [{pipeline_mode = #tpu.pipeline_mode<synchronous>, transform_indices = @transform_0, window_bounds = array<i64: 64, 32>}, {pipeline_mode = #tpu.pipeline_mode<synchronous>, transform_indices = @transform_1, window_bounds = array<i64: 64, 32>}, {transform_indices = @transform_2, window_bounds = array<i64: 8, 32>}, {pipeline_mode = #tpu.pipeline_mode<synchronous>, transform_indices = @transform_3, window_bounds = array<i64: 96, 32>}, {pipeline_mode = #tpu.pipeline_mode<synchronous>, transform_indices = @transform_4, window_bounds = array<i64: 1, 32>}, {pipeline_mode = #tpu.pipeline_mode<synchronous>, transform_indices = @transform_5, window_bounds = array<i64: 32, 2>}, {pipeline_mode = #tpu.pipeline_mode<synchronous>, transform_indices = @transform_6, window_bounds = array<i64: 1, 2>}, {transform_indices = @transform_7, window_bounds = array<i64: 8, 128>}]} {
    %c0 = arith.constant 0 : index
    %0 = memref.load %arg1[%c0] : memref<2xi32, #tpu.memory_space<smem>>
    %c1_i32 = arith.constant 1 : i32
    %1 = arith.maxsi %0, %c1_i32 : i32
    %c1 = arith.constant 1 : index
    %2 = memref.load %arg1[%c1] : memref<2xi32, #tpu.memory_space<smem>>
    %c1_i32_0 = arith.constant 1 : i32
    %3 = arith.maxsi %2, %c1_i32_0 : i32
    %4 = tpu.iota {dimensions = array<i32: 0>} : vector<64x32xi32>
    %5 = vector.broadcast %1 : i32 to vector<64x32xi32>
    %6 = arith.cmpi slt, %4, %5 : vector<64x32xi32>
    %c0_1 = arith.constant 0 : index
    %c0_2 = arith.constant 0 : index
    %7 = vector.load %arg2[%c0_1, %c0_2] : memref<64x32xf32, #tpu.memory_space<vmem>>, vector<64x32xf32>
    %cst = arith.constant 0.000000e+00 : f32
    %8 = vector.broadcast %cst : f32 to vector<64x32xf32>
    %9 = arith.select %6, %7, %8 : vector<64x32xi1>, vector<64x32xf32>
    %cst_3 = arith.constant dense<0.000000e+00> : vector<32xf32>
    %10 = vector.multi_reduction <add>, %9, %cst_3 [0] : vector<64x32xf32> to vector<32xf32>
    %11 = vector.shape_cast %10 : vector<32xf32> to vector<1x32xf32>
    %12 = vector.broadcast %3 : i32 to vector<64x32xi32>
    %13 = arith.cmpi slt, %4, %12 : vector<64x32xi32>
    %c0_4 = arith.constant 0 : index
    %c0_5 = arith.constant 0 : index
    %14 = vector.load %arg3[%c0_4, %c0_5] : memref<64x32xf32, #tpu.memory_space<vmem>>, vector<64x32xf32>
    %cst_6 = arith.constant 0.000000e+00 : f32
    %15 = vector.broadcast %cst_6 : f32 to vector<64x32xf32>
    %16 = arith.select %13, %14, %15 : vector<64x32xi1>, vector<64x32xf32>
    %cst_7 = arith.constant dense<0.000000e+00> : vector<32xf32>
    %17 = vector.multi_reduction <add>, %16, %cst_7 [0] : vector<64x32xf32> to vector<32xf32>
    %18 = vector.shape_cast %17 : vector<32xf32> to vector<1x32xf32>
    %19 = arith.sitofp %1 : i32 to f32
    %cst_8 = arith.constant 1.000000e+00 : f32
    %20 = arith.divf %cst_8, %19 : f32
    %21 = vector.broadcast %20 : f32 to vector<1x32xf32>
    %22 = arith.mulf %11, %21 : vector<1x32xf32>
    %23 = arith.sitofp %3 : i32 to f32
    %cst_9 = arith.constant 1.000000e+00 : f32
    %24 = arith.divf %cst_9, %23 : f32
    %25 = vector.broadcast %24 : f32 to vector<1x32xf32>
    %26 = arith.mulf %18, %25 : vector<1x32xf32>
    %c0_10 = arith.constant 0 : index
    %c0_11 = arith.constant 0 : index
    %27 = vector.load %arg4[%c0_10, %c0_11] : memref<8x32xf32, #tpu.memory_space<vmem>>, vector<8x32xf32>
    %c64 = arith.constant 64 : index
    %c0_12 = arith.constant 0 : index
    %28 = vector.load %arg5[%c64, %c0_12] : memref<96x32xf32, #tpu.memory_space<vmem>>, vector<32x32xf32>
    %cst_13 = arith.constant dense<0.000000e+00> : vector<8x32xf32>
    %29 = tpu.matmul %27, %28, %cst_13 {dimension_numbers = #tpu.dot_dimension_numbers<[1], [0], [0], [1], [0, 0, 1, 1], [], []>} : vector<8x32xf32>, vector<32x32xf32>, vector<8x32xf32> -> vector<8x32xf32>
    %c0_14 = arith.constant 0 : index
    %c0_15 = arith.constant 0 : index
    %30 = vector.load %arg5[%c0_14, %c0_15] : memref<96x32xf32, #tpu.memory_space<vmem>>, vector<32x32xf32>
    %cst_16 = arith.constant dense<0.000000e+00> : vector<1x32xf32>
    %31 = tpu.matmul %22, %30, %cst_16 {dimension_numbers = #tpu.dot_dimension_numbers<[1], [0], [0], [1], [0, 0, 1, 1], [], []>} : vector<1x32xf32>, vector<32x32xf32>, vector<1x32xf32> -> vector<1x32xf32>
    %32 = vector.broadcast %31 : vector<1x32xf32> to vector<8x32xf32>
    %33 = arith.addf %29, %32 : vector<8x32xf32>
    %c32 = arith.constant 32 : index
    %c0_17 = arith.constant 0 : index
    %34 = vector.load %arg5[%c32, %c0_17] : memref<96x32xf32, #tpu.memory_space<vmem>>, vector<32x32xf32>
    %cst_18 = arith.constant dense<0.000000e+00> : vector<1x32xf32>
    %35 = tpu.matmul %26, %34, %cst_18 {dimension_numbers = #tpu.dot_dimension_numbers<[1], [0], [0], [1], [0, 0, 1, 1], [], []>} : vector<1x32xf32>, vector<32x32xf32>, vector<1x32xf32> -> vector<1x32xf32>
    %36 = vector.broadcast %35 : vector<1x32xf32> to vector<8x32xf32>
    %37 = arith.addf %33, %36 : vector<8x32xf32>
    %c0_19 = arith.constant 0 : index
    %c0_20 = arith.constant 0 : index
    %38 = vector.load %arg6[%c0_19, %c0_20] : memref<1x32xf32, #tpu.memory_space<vmem>>, vector<1x32xf32>
    %39 = vector.broadcast %38 : vector<1x32xf32> to vector<8x32xf32>
    %40 = arith.addf %37, %39 : vector<8x32xf32>
    %cst_21 = arith.constant 0.000000e+00 : f32
    %41 = vector.broadcast %cst_21 : f32 to vector<8x32xf32>
    %42 = arith.maximumf %40, %41 : vector<8x32xf32>
    %c0_22 = arith.constant 0 : index
    %c0_23 = arith.constant 0 : index
    %43 = vector.load %arg7[%c0_22, %c0_23] : memref<32x2xf32, #tpu.memory_space<vmem>>, vector<32x2xf32>
    %cst_24 = arith.constant dense<0.000000e+00> : vector<8x2xf32>
    %44 = tpu.matmul %42, %43, %cst_24 {dimension_numbers = #tpu.dot_dimension_numbers<[1], [0], [0], [1], [0, 0, 1, 1], [], []>} : vector<8x32xf32>, vector<32x2xf32>, vector<8x2xf32> -> vector<8x2xf32>
    %c0_25 = arith.constant 0 : index
    %c0_26 = arith.constant 0 : index
    %45 = vector.load %arg8[%c0_25, %c0_26] : memref<1x2xf32, #tpu.memory_space<vmem>>, vector<1x2xf32>
    %46 = vector.broadcast %45 : vector<1x2xf32> to vector<8x2xf32>
    %47 = arith.addf %44, %46 : vector<8x2xf32>
    %cst_27 = arith.constant dense<0xFF800000> : vector<8xf32>
    %48 = vector.multi_reduction <maximumf>, %47, %cst_27 [1] : vector<8x2xf32> to vector<8xf32>
    %49 = vector.shape_cast %48 : vector<8xf32> to vector<8x1xf32>
    %50 = vector.broadcast %49 : vector<8x1xf32> to vector<8x2xf32>
    %51 = arith.subf %47, %50 : vector<8x2xf32>
    %52 = math.exp %51 : vector<8x2xf32>
    %cst_28 = arith.constant dense<0.000000e+00> : vector<8xf32>
    %53 = vector.multi_reduction <add>, %52, %cst_28 [1] : vector<8x2xf32> to vector<8xf32>
    %54 = vector.shape_cast %53 : vector<8xf32> to vector<8x1xf32>
    %55 = tpu.reciprocal %54 {approx = true} : vector<8x1xf32> -> vector<8x1xf32>
    %56 = vector.broadcast %55 : vector<8x1xf32> to vector<8x2xf32>
    %57 = arith.mulf %52, %56 : vector<8x2xf32>
    %cst_29 = arith.constant 0.000000e+00 : f32
    %58 = vector.broadcast %cst_29 : f32 to vector<8x128xf32>
    %c0_30 = arith.constant 0 : index
    %c0_31 = arith.constant 0 : index
    %59 = vector.load %arg9[%c0_30, %c0_31] : memref<8x128xf32, #tpu.memory_space<vmem>>, vector<8x128xf32>
    tpu.vector_store %arg9[%c0_30, %c0_31], %58 {strides = array<i32>} : memref<8x128xf32, #tpu.memory_space<vmem>>, vector<8x128xf32>,
    %60 = vector.shape_cast %22 : vector<1x32xf32> to vector<1x32xf32>
    %61 = vector.broadcast %60 : vector<1x32xf32> to vector<8x32xf32>
    %c0_32 = arith.constant 0 : index
    %c0_33 = arith.constant 0 : index
    %62 = vector.load %arg9[%c0_32, %c0_33] : memref<8x128xf32, #tpu.memory_space<vmem>>, vector<8x32xf32>
    tpu.vector_store %arg9[%c0_32, %c0_33], %61 {strides = array<i32>} : memref<8x128xf32, #tpu.memory_space<vmem>>, vector<8x32xf32>,
    %63 = vector.shape_cast %26 : vector<1x32xf32> to vector<1x32xf32>
    %64 = vector.broadcast %63 : vector<1x32xf32> to vector<8x32xf32>
    %c0_34 = arith.constant 0 : index
    %c32_35 = arith.constant 32 : index
    %65 = vector.load %arg9[%c0_34, %c32_35] : memref<8x128xf32, #tpu.memory_space<vmem>>, vector<8x32xf32>
    tpu.vector_store %arg9[%c0_34, %c32_35], %64 {strides = array<i32>} : memref<8x128xf32, #tpu.memory_space<vmem>>, vector<8x32xf32>,
    %c0_36 = arith.constant 0 : index
    %c64_37 = arith.constant 64 : index
    %66 = vector.load %arg9[%c0_36, %c64_37] : memref<8x128xf32, #tpu.memory_space<vmem>>, vector<8x32xf32>
    tpu.vector_store %arg9[%c0_36, %c64_37], %27 {strides = array<i32>} : memref<8x128xf32, #tpu.memory_space<vmem>>, vector<8x32xf32>,
    %c0_38 = arith.constant 0 : index
    %c96 = arith.constant 96 : index
    %67 = vector.load %arg9[%c0_38, %c96] : memref<8x128xf32, #tpu.memory_space<vmem>>, vector<8x2xf32>
    tpu.vector_store %arg9[%c0_38, %c96], %57 {strides = array<i32>} : memref<8x128xf32, #tpu.memory_space<vmem>>, vector<8x2xf32>,
    return
  }
  func.func @transform_0(%arg0: i32, %arg1: memref<2xi32, #tpu.memory_space<smem>>) -> (i32, i32) {
    %c0_i32 = arith.constant 0 : i32
    %c0_i32_0 = arith.constant 0 : i32
    %c0_i32_1 = arith.constant 0 : i32
    return %c0_i32, %c0_i32_0 : i32, i32
  }
  func.func @transform_1(%arg0: i32, %arg1: memref<2xi32, #tpu.memory_space<smem>>) -> (i32, i32) {
    %c0_i32 = arith.constant 0 : i32
    %c0_i32_0 = arith.constant 0 : i32
    %c0_i32_1 = arith.constant 0 : i32
    return %c0_i32, %c0_i32_0 : i32, i32
  }
  func.func @transform_2(%arg0: i32, %arg1: memref<2xi32, #tpu.memory_space<smem>>) -> (i32, i32) {
    %c0_i32 = arith.constant 0 : i32
    %c0_i32_0 = arith.constant 0 : i32
    return %arg0, %c0_i32 : i32, i32
  }
  func.func @transform_3(%arg0: i32, %arg1: memref<2xi32, #tpu.memory_space<smem>>) -> (i32, i32) {
    %c0_i32 = arith.constant 0 : i32
    %c0_i32_0 = arith.constant 0 : i32
    %c0_i32_1 = arith.constant 0 : i32
    return %c0_i32, %c0_i32_0 : i32, i32
  }
  func.func @transform_4(%arg0: i32, %arg1: memref<2xi32, #tpu.memory_space<smem>>) -> (i32, i32) {
    %c0_i32 = arith.constant 0 : i32
    %c0_i32_0 = arith.constant 0 : i32
    %c0_i32_1 = arith.constant 0 : i32
    return %c0_i32, %c0_i32_0 : i32, i32
  }
  func.func @transform_5(%arg0: i32, %arg1: memref<2xi32, #tpu.memory_space<smem>>) -> (i32, i32) {
    %c0_i32 = arith.constant 0 : i32
    %c0_i32_0 = arith.constant 0 : i32
    %c0_i32_1 = arith.constant 0 : i32
    return %c0_i32, %c0_i32_0 : i32, i32
  }
  func.func @transform_6(%arg0: i32, %arg1: memref<2xi32, #tpu.memory_space<smem>>) -> (i32, i32) {
    %c0_i32 = arith.constant 0 : i32
    %c0_i32_0 = arith.constant 0 : i32
    %c0_i32_1 = arith.constant 0 : i32
    return %c0_i32, %c0_i32_0 : i32, i32
  }
  func.func @transform_7(%arg0: i32, %arg1: memref<2xi32, #tpu.memory_space<smem>>) -> (i32, i32) {
    %c0_i32 = arith.constant 0 : i32
    %c0_i32_0 = arith.constant 0 : i32
    return %arg0, %c0_i32 : i32, i32
  }
}

</mosaic_0001>

<llo_original>
// kernel: text_actor_forward.1
$region0: #{text_actor_forward.1}
  #allocation0 [shape = 'u32[]', space=smem, size = 0x4, offset = 0x4, fixed_abs, tag = 'smem constant byte address 0x4 - core index']
  #allocation1 [shape = 'u32[144,128]{1,0:T(1,128)}', space=vmem, size = 0x12000, scoped, tag = 'internal scratch']
  #allocation2 [shape = 's32[1]{0}', space=sflag, size = 0x4, scoped, tag = 'scoped memory for text_actor_forward.1']
  #allocation3 [shape = 'u8[512]{0}', space=smem, size = 0x200, scoped, tag = 'prefetched SMEM operand 0']
  %s0 = inlined_call_operand.vmem [shape: s32[2], index: 0, kind: input, shape index: {}]
  %s1 = inlined_call_operand.vmem [shape: f32[64,32], index: 1, kind: input, shape index: {}]
  %s2 = inlined_call_operand.vmem [shape: f32[64,32], index: 2, kind: input, shape index: {}]
  %s3 = inlined_call_operand.vmem [shape: f32[8,32], index: 3, kind: input, shape index: {}]
  %s4 = inlined_call_operand.vmem [shape: f32[96,32], index: 4, kind: input, shape index: {}]
  %s5 = inlined_call_operand.vmem [shape: f32[1,32], index: 5, kind: input, shape index: {}]
  %s6 = inlined_call_operand.vmem [shape: f32[32,2], index: 6, kind: input, shape index: {}]
  %s7 = inlined_call_operand.vmem [shape: f32[1,2], index: 7, kind: input, shape index: {}]
  %s8 = inlined_call_operand.vmem [shape: f32[8,128], index: 8, kind: output, shape index: {}]
  %s9 = sld [smem:[#allocation0]]
  $region38: #{text_actor_forward.1} parent=0
    _
  %s11 = ssub.s32 1, %s9
  %s12 = scalar_select 0, %s11, %s9
  %s13 = sshll.u32 %s0, 4
  %s14 = int_to_ptr.vmem [resolvable:$true] %s13
  %16 = dma.vmem_to_smem %s14, 16, [#allocation3], [#allocation2]
  %17 = dma.done [#allocation2], 16
  %18 = sfence
  // Predicated region
  $region2: #{text_actor_forward.1} parent=0 // pred_check
    _
  $region3: #{text_actor_forward.1} parent=0 // pred_check_branch
    %20 = sbr.rel (0) target = $region5
  $region4: #{text_actor_forward.1} parent=0 // pred_region
    _
  $region5: #{text_actor_forward.1} parent=0 // pred_fallthru
    _
  // Predicated region
  $region6: #{text_actor_forward.1} parent=0 // pred_check
    _
  $region7: #{text_actor_forward.1} parent=0 // pred_check_branch
    %22 = sbr.rel (0) target = $region9
  $region8: #{text_actor_forward.1} parent=0 // pred_region
    _
  $region9: #{text_actor_forward.1} parent=0 // pred_fallthru
    _
  // Predicated region
  $region10: #{text_actor_forward.1} parent=0 // pred_check
    _
  $region11: #{text_actor_forward.1} parent=0 // pred_check_branch
    %24 = sbr.rel (0) target = $region13
  $region12: #{text_actor_forward.1} parent=0 // pred_region
    _
  $region13: #{text_actor_forward.1} parent=0 // pred_fallthru
    _
  // Predicated region
  $region14: #{text_actor_forward.1} parent=0 // pred_check
    _
  $region15: #{text_actor_forward.1} parent=0 // pred_check_branch
    %26 = sbr.rel (0) target = $region17
  $region16: #{text_actor_forward.1} parent=0 // pred_region
    _
  $region17: #{text_actor_forward.1} parent=0 // pred_fallthru
    _
  // Predicated region
  $region18: #{text_actor_forward.1} parent=0 // pred_check
    _
  $region19: #{text_actor_forward.1} parent=0 // pred_check_branch
    %28 = sbr.rel (0) target = $region21
  $region20: #{text_actor_forward.1} parent=0 // pred_region
    _
  $region21: #{text_actor_forward.1} parent=0 // pred_fallthru
    _
  // Predicated region
  $region22: #{text_actor_forward.1} parent=0 // pred_check
    _
  $region23: #{text_actor_forward.1} parent=0 // pred_check_branch
    %30 = sbr.rel (0) target = $region25
  $region24: #{text_actor_forward.1} parent=0 // pred_region
    _
  $region25: #{text_actor_forward.1} parent=0 // pred_fallthru
    _
  // Predicated region
  $region26: #{text_actor_forward.1} parent=0 // pred_check
    _
  $region27: #{text_actor_forward.1} parent=0 // pred_check_branch
    %32 = sbr.rel (0) target = $region29
  $region28: #{text_actor_forward.1} parent=0 // pred_region
    _
  $region29: #{text_actor_forward.1} parent=0 // pred_fallthru
    _
  %s33 = sld [smem:[#allocation3]]
  %p34 = scmp.gt.s32.totalorder %s33, 1
  %s35 = scalar_select %p34, %s33, 1
  %s36 = sld [smem:[#allocation3 + $0x1]]
  %p37 = scmp.gt.s32.totalorder %s36, 1
  %s38 = scalar_select %p37, %s36, 1
  %v39 = vlaneseq
  %v40 = vshrl.u32 %v39, 7
  %v41 = vadd.s32 %v40, 8
  %v42 = vadd.s32 %v40, 16
  %v43 = vadd.s32 %v40, 24
  %v44 = vadd.s32 %v40, 32
  %v45 = vadd.s32 %v40, 40
  %v46 = vadd.s32 %v40, 48
  %v47 = vadd.s32 %v40, 56
  %v48 = vstv %s35
  %vm49 = vcmp.lt.s32.totalorder %v40, %v48
  %vm50 = vcmp.lt.s32.totalorder %v41, %v48
  %vm51 = vcmp.lt.s32.totalorder %v42, %v48
  %vm52 = vcmp.lt.s32.totalorder %v43, %v48
  %vm53 = vcmp.lt.s32.totalorder %v44, %v48
  %vm54 = vcmp.lt.s32.totalorder %v45, %v48
  %vm55 = vcmp.lt.s32.totalorder %v46, %v48
  %vm56 = vcmp.lt.s32.totalorder %v47, %v48
  %v57 = vld [vmem:[%s1] sm:$0xff]
  %v58 = vld [vmem:[%s1 + $0x8] sm:$0xff]
  %v59 = vld [vmem:[%s1 + $0x10] sm:$0xff]
  %v60 = vld [vmem:[%s1 + $0x18] sm:$0xff]
  %v61 = vld [vmem:[%s1 + $0x20] sm:$0xff]
  %v62 = vld [vmem:[%s1 + $0x28] sm:$0xff]
  %v63 = vld [vmem:[%s1 + $0x30] sm:$0xff]
  %v64 = vld [vmem:[%s1 + $0x38] sm:$0xff]
  %v65 = vsel %vm49, %v57, 0.0
  %v66 = vsel %vm50, %v58, 0.0
  %v67 = vsel %vm51, %v59, 0.0
  %v68 = vsel %vm52, %v60, 0.0
  %v69 = vsel %vm53, %v61, 0.0
  %v70 = vsel %vm54, %v62, 0.0
  %v71 = vsel %vm55, %v63, 0.0
  %v72 = vsel %vm56, %v64, 0.0
  %vm73 = vcmask 261120
  %v74 = vsel %vm73, %v65, 0.0
  %v75 = vsel %vm73, %v66, 0.0
  %v76 = vadd.f32 %v74, %v75
  %v77 = vsel %vm73, %v67, 0.0
  %v78 = vadd.f32 %v76, %v77
  %v79 = vsel %vm73, %v68, 0.0
  %v80 = vadd.f32 %v78, %v79
  %v81 = vsel %vm73, %v69, 0.0
  %v82 = vadd.f32 %v80, %v81
  %v83 = vsel %vm73, %v70, 0.0
  %v84 = vadd.f32 %v82, %v83
  %v85 = vsel %vm73, %v71, 0.0
  %v86 = vadd.f32 %v84, %v85
  %v87 = vsel %vm73, %v72, 0.0
  %v88 = vadd.f32 %v86, %v87
  %v89 = vrot.slane %v88, 4
  %v90 = vadd.f32 %v88, %v89
  %v91 = vrot.slane %v90, 2
  %v92 = vadd.f32 %v90, %v91
  %v93 = vrot.slane %v92, 1
  %v94 = vadd.f32 %v92, %v93
  %v95 = vstv %s38
  %vm96 = vcmp.lt.s32.totalorder %v40, %v95
  %vm97 = vcmp.lt.s32.totalorder %v41, %v95
  %vm98 = vcmp.lt.s32.totalorder %v42, %v95
  %vm99 = vcmp.lt.s32.totalorder %v43, %v95
  %vm100 = vcmp.lt.s32.totalorder %v44, %v95
  %vm101 = vcmp.lt.s32.totalorder %v45, %v95
  %vm102 = vcmp.lt.s32.totalorder %v46, %v95
  %vm103 = vcmp.lt.s32.totalorder %v47, %v95
  %v104 = vld [vmem:[%s2] sm:$0xff]
  %v105 = vld [vmem:[%s2 + $0x8] sm:$0xff]
  %v106 = vld [vmem:[%s2 + $0x10] sm:$0xff]
  %v107 = vld [vmem:[%s2 + $0x18] sm:$0xff]
  %v108 = vld [vmem:[%s2 + $0x20] sm:$0xff]
  %v109 = vld [vmem:[%s2 + $0x28] sm:$0xff]
  %v110 = vld [vmem:[%s2 + $0x30] sm:$0xff]
  %v111 = vld [vmem:[%s2 + $0x38] sm:$0xff]
  %v112 = vsel %vm96, %v104, 0.0
  %v113 = vsel %vm97, %v105, 0.0
  %v114 = vsel %vm98, %v106, 0.0
  %v115 = vsel %vm99, %v107, 0.0
  %v116 = vsel %vm100, %v108, 0.0
  %v117 = vsel %vm101, %v109, 0.0
  %v118 = vsel %vm102, %v110, 0.0
  %v119 = vsel %vm103, %v111, 0.0
  %v120 = vsel %vm73, %v112, 0.0
  %v121 = vsel %vm73, %v113, 0.0
  %v122 = vadd.f32 %v120, %v121
  %v123 = vsel %vm73, %v114, 0.0
  %v124 = vadd.f32 %v122, %v123
  %v125 = vsel %vm73, %v115, 0.0
  %v126 = vadd.f32 %v124, %v125
  %v127 = vsel %vm73, %v116, 0.0
  %v128 = vadd.f32 %v126, %v127
  %v129 = vsel %vm73, %v117, 0.0
  %v130 = vadd.f32 %v128, %v129
  %v131 = vsel %vm73, %v118, 0.0
  %v132 = vadd.f32 %v130, %v131
  %v133 = vsel %vm73, %v119, 0.0
  %v134 = vadd.f32 %v132, %v133
  %v135 = vrot.slane %v134, 4
  %v136 = vadd.f32 %v134, %v135
  %v137 = vrot.slane %v136, 2
  %v138 = vadd.f32 %v136, %v137
  %v139 = vrot.slane %v138, 1
  %v140 = vadd.f32 %v138, %v139
  %s141 = scvt.s32.f32 %s35
  %v142 = vstv %s141
  %v143 = vrcp.pop %v142
  %s144 = vtos %v143
  %v145 = vstv %s144
  %v146 = vmul.f32 %v94, %v145
  %s147 = scvt.s32.f32 %s38
  %v148 = vstv %s147
  %v149 = vrcp.pop %v148
  %s150 = vtos %v149
  %v151 = vstv %s150
  %v152 = vmul.f32 %v140, %v151
  %v153 = vld [vmem:[%s3] sm:$0xff]
  %v154 = vld [vmem:[%s4 + $0x40] sm:$0xff]
  %v155 = vld [vmem:[%s4 + $0x48] sm:$0xff]
  %v156 = vld [vmem:[%s4 + $0x50] sm:$0xff]
  %v157 = vld [vmem:[%s4 + $0x58] sm:$0xff]
  %v158 = vld [vmem:[%s4] sm:$0xff]
  %v159 = vld [vmem:[%s4 + $0x8] sm:$0xff]
  %v160 = vld [vmem:[%s4 + $0x10] sm:$0xff]
  %v161 = vld [vmem:[%s4 + $0x18] sm:$0xff]
  %v163 = vsel %vm73, %v146, 0
  %165 = vmatprep.subr.mxu0 0.0
  %166 = vmatpush1.msra.mxu0 %v158
  %167 = vmatprep.subr.mxu0 0.0
  %168 = vmatpush1.msra.mxu0 %v159
  %169 = vmatprep.subr.mxu0 0.0
  %170 = vmatpush1.msra.mxu0 %v160
  %171 = vmatprep.subr.mxu0 0.0
  %172 = vmatpush1.msra.mxu0 %v161
  %173 = vmatprep.subr.mxu0 0.0
  %174 = vmatpush1.msra.mxu0 0.0
  %175 = vmatprep.subr.mxu0 0.0
  %176 = vmatpush1.msra.mxu0 0.0
  %177 = vmatprep.subr.mxu0 0.0
  %178 = vmatpush1.msra.mxu0 0.0
  %179 = vmatprep.subr.mxu0 0.0
  %180 = vmatpush1.msra.mxu0 0.0
  %181 = vmatprep.subr.mxu0 0.0
  %182 = vmatpush1.msra.mxu0 0.0
  %183 = vmatprep.subr.mxu0 0.0
  %184 = vmatpush1.msra.mxu0 0.0
  %185 = vmatprep.subr.mxu0 0.0
  %186 = vmatpush1.msra.mxu0 0.0
  %187 = vmatprep.subr.mxu0 0.0
  %188 = vmatpush1.msra.mxu0 0.0
  %189 = vmatprep.subr.mxu0 0.0
  %190 = vmatpush1.msra.mxu0 0.0
  %191 = vmatprep.subr.mxu0 0.0
  %192 = vmatpush1.msra.mxu0 0.0
  %193 = vmatprep.subr.mxu0 0.0
  %194 = vmatpush1.msra.mxu0 0.0
  %195 = vmatprep.subr.mxu0 0.0
  %196 = vmatpush1.msra.mxu0 0.0
  %197 = vmatprep.subr.mxu0 0.0
  %198 = vmatpush1.msra.mxu0 0.0
  %199 = vmatprep.subr.mxu0 0.0
  %200 = vmatpush1.msra.mxu0 0.0
  %201 = vmatprep.subr.mxu0 0.0
  %202 = vmatpush1.msra.mxu0 0.0
  %203 = vmatprep.subr.mxu0 0.0
  %204 = vmatpush1.msra.mxu0 0.0
  %205 = vmatprep.subr.mxu0 0.0
  %206 = vmatpush1.msra.mxu0 0.0
  %207 = vmatprep.subr.mxu0 0.0
  %208 = vmatpush1.msra.mxu0 0.0
  %209 = vmatprep.subr.mxu0 0.0
  %210 = vmatpush1.msra.mxu0 0.0
  %211 = vmatprep.subr.mxu0 0.0
  %212 = vmatpush1.msra.mxu0 0.0
  %213 = vmatprep.subr.mxu0 0.0
  %214 = vmatpush1.msra.mxu0 0.0
  %215 = vmatprep.subr.mxu0 0.0
  %216 = vmatpush1.msra.mxu0 0.0
  %217 = vmatprep.subr.mxu0 0.0
  %218 = vmatpush1.msra.mxu0 0.0
  %219 = vmatprep.subr.mxu0 0.0
  %220 = vmatpush1.msra.mxu0 0.0
  %221 = vmatprep.subr.mxu0 0.0
  %222 = vmatpush1.msra.mxu0 0.0
  %223 = vmatprep.subr.mxu0 0.0
  %224 = vmatpush1.msra.mxu0 0.0
  %225 = vmatprep.subr.mxu0 0.0
  %226 = vmatpush1.msra.mxu0 0.0
  %227 = vmatprep.subr.mxu0 0.0
  %228 = vmatpush1.msra.mxu0 0.0
  %229 = vmatprep.mubr.f32.mxu0 0.0
  %230 = vmatmul.mubr.f32.gmra.mrb[0].mxu0 %v163
  %v231 = vpop.f32.mrb[0].mxu0
  %v232 = vadd.f32 0.0, %v231
  %v233 = vpop.f32.mrb[0].mxu0
  %234 = vdwg.mxu0
  %v235 = vlaneseq
  %v236 = vshrl.u32 %v235, 7
  %v237 = vsub.s32 0, %v236
  %v238 = vrot.slane %v232, %v237
  %v240 = vsel %vm73, %v153, 0
  %242 = vmatprep.subr.mxu0 0.0
  %243 = vmatpush1.msra.mxu0 %v154
  %244 = vmatprep.subr.mxu0 0.0
  %245 = vmatpush1.msra.mxu0 %v155
  %246 = vmatprep.subr.mxu0 0.0
  %247 = vmatpush1.msra.mxu0 %v156
  %248 = vmatprep.subr.mxu0 0.0
  %249 = vmatpush1.msra.mxu0 %v157
  %250 = vmatprep.subr.mxu0 0.0
  %251 = vmatpush1.msra.mxu0 0.0
  %252 = vmatprep.subr.mxu0 0.0
  %253 = vmatpush1.msra.mxu0 0.0
  %254 = vmatprep.subr.mxu0 0.0
  %255 = vmatpush1.msra.mxu0 0.0
  %256 = vmatprep.subr.mxu0 0.0
  %257 = vmatpush1.msra.mxu0 0.0
  %258 = vmatprep.subr.mxu0 0.0
  %259 = vmatpush1.msra.mxu0 0.0
  %260 = vmatprep.subr.mxu0 0.0
  %261 = vmatpush1.msra.mxu0 0.0
  %262 = vmatprep.subr.mxu0 0.0
  %263 = vmatpush1.msra.mxu0 0.0
  %264 = vmatprep.subr.mxu0 0.0
  %265 = vmatpush1.msra.mxu0 0.0
  %266 = vmatprep.subr.mxu0 0.0
  %267 = vmatpush1.msra.mxu0 0.0
  %268 = vmatprep.subr.mxu0 0.0
  %269 = vmatpush1.msra.mxu0 0.0
  %270 = vmatprep.subr.mxu0 0.0
  %271 = vmatpush1.msra.mxu0 0.0
  %272 = vmatprep.subr.mxu0 0.0
  %273 = vmatpush1.msra.mxu0 0.0
  %274 = vmatprep.subr.mxu0 0.0
  %275 = vmatpush1.msra.mxu0 0.0
  %276 = vmatprep.subr.mxu0 0.0
  %277 = vmatpush1.msra.mxu0 0.0
  %278 = vmatprep.subr.mxu0 0.0
  %279 = vmatpush1.msra.mxu0 0.0
  %280 = vmatprep.subr.mxu0 0.0
  %281 = vmatpush1.msra.mxu0 0.0
  %282 = vmatprep.subr.mxu0 0.0
  %283 = vmatpush1.msra.mxu0 0.0
  %284 = vmatprep.subr.mxu0 0.0
  %285 = vmatpush1.msra.mxu0 0.0
  %286 = vmatprep.subr.mxu0 0.0
  %287 = vmatpush1.msra.mxu0 0.0
  %288 = vmatprep.subr.mxu0 0.0
  %289 = vmatpush1.msra.mxu0 0.0
  %290 = vmatprep.subr.mxu0 0.0
  %291 = vmatpush1.msra.mxu0 0.0
  %292 = vmatprep.subr.mxu0 0.0
  %293 = vmatpush1.msra.mxu0 0.0
  %294 = vmatprep.subr.mxu0 0.0
  %295 = vmatpush1.msra.mxu0 0.0
  %296 = vmatprep.subr.mxu0 0.0
  %297 = vmatpush1.msra.mxu0 0.0
  %298 = vmatprep.subr.mxu0 0.0
  %299 = vmatpush1.msra.mxu0 0.0
  %300 = vmatprep.subr.mxu0 0.0
  %301 = vmatpush1.msra.mxu0 0.0
  %302 = vmatprep.subr.mxu0 0.0
  %303 = vmatpush1.msra.mxu0 0.0
  %304 = vmatprep.subr.mxu0 0.0
  %305 = vmatpush1.msra.mxu0 0.0
  %306 = vmatprep.mubr.f32.mxu0 0.0
  %307 = vmatmul.mubr.f32.gmra.mrb[0].mxu0 %v240
  %v308 = vpop.f32.mrb[0].mxu0
  %v309 = vadd.f32 %v238, %v308
  %v310 = vpop.f32.mrb[0].mxu0
  %311 = vdwg.mxu0
  %v312 = vld [vmem:[%s4 + $0x20] sm:$0xff]
  %v313 = vld [vmem:[%s4 + $0x28] sm:$0xff]
  %v314 = vld [vmem:[%s4 + $0x30] sm:$0xff]
  %v315 = vld [vmem:[%s4 + $0x38] sm:$0xff]
  %v317 = vsel %vm73, %v152, 0
  %319 = vmatprep.subr.mxu0 0.0
  %320 = vmatpush1.msra.mxu0 %v312
  %321 = vmatprep.subr.mxu0 0.0
  %322 = vmatpush1.msra.mxu0 %v313
  %323 = vmatprep.subr.mxu0 0.0
  %324 = vmatpush1.msra.mxu0 %v314
  %325 = vmatprep.subr.mxu0 0.0
  %326 = vmatpush1.msra.mxu0 %v315
  %327 = vmatprep.subr.mxu0 0.0
  %328 = vmatpush1.msra.mxu0 0.0
  %329 = vmatprep.subr.mxu0 0.0
  %330 = vmatpush1.msra.mxu0 0.0
  %331 = vmatprep.subr.mxu0 0.0
  %332 = vmatpush1.msra.mxu0 0.0
  %333 = vmatprep.subr.mxu0 0.0
  %334 = vmatpush1.msra.mxu0 0.0
  %335 = vmatprep.subr.mxu0 0.0
  %336 = vmatpush1.msra.mxu0 0.0
  %337 = vmatprep.subr.mxu0 0.0
  %338 = vmatpush1.msra.mxu0 0.0
  %339 = vmatprep.subr.mxu0 0.0
  %340 = vmatpush1.msra.mxu0 0.0
  %341 = vmatprep.subr.mxu0 0.0
  %342 = vmatpush1.msra.mxu0 0.0
  %343 = vmatprep.subr.mxu0 0.0
  %344 = vmatpush1.msra.mxu0 0.0
  %345 = vmatprep.subr.mxu0 0.0
  %346 = vmatpush1.msra.mxu0 0.0
  %347 = vmatprep.subr.mxu0 0.0
  %348 = vmatpush1.msra.mxu0 0.0
  %349 = vmatprep.subr.mxu0 0.0
  %350 = vmatpush1.msra.mxu0 0.0
  %351 = vmatprep.subr.mxu0 0.0
  %352 = vmatpush1.msra.mxu0 0.0
  %353 = vmatprep.subr.mxu0 0.0
  %354 = vmatpush1.msra.mxu0 0.0
  %355 = vmatprep.subr.mxu0 0.0
  %356 = vmatpush1.msra.mxu0 0.0
  %357 = vmatprep.subr.mxu0 0.0
  %358 = vmatpush1.msra.mxu0 0.0
  %359 = vmatprep.subr.mxu0 0.0
  %360 = vmatpush1.msra.mxu0 0.0
  %361 = vmatprep.subr.mxu0 0.0
  %362 = vmatpush1.msra.mxu0 0.0
  %363 = vmatprep.subr.mxu0 0.0
  %364 = vmatpush1.msra.mxu0 0.0
  %365 = vmatprep.subr.mxu0 0.0
  %366 = vmatpush1.msra.mxu0 0.0
  %367 = vmatprep.subr.mxu0 0.0
  %368 = vmatpush1.msra.mxu0 0.0
  %369 = vmatprep.subr.mxu0 0.0
  %370 = vmatpush1.msra.mxu0 0.0
  %371 = vmatprep.subr.mxu0 0.0
  %372 = vmatpush1.msra.mxu0 0.0
  %373 = vmatprep.subr.mxu0 0.0
  %374 = vmatpush1.msra.mxu0 0.0
  %375 = vmatprep.subr.mxu0 0.0
  %376 = vmatpush1.msra.mxu0 0.0
  %377 = vmatprep.subr.mxu0 0.0
  %378 = vmatpush1.msra.mxu0 0.0
  %379 = vmatprep.subr.mxu0 0.0
  %380 = vmatpush1.msra.mxu0 0.0
  %381 = vmatprep.subr.mxu0 0.0
  %382 = vmatpush1.msra.mxu0 0.0
  %383 = vmatprep.mubr.f32.mxu0 0.0
  %384 = vmatmul.mubr.f32.gmra.mrb[0].mxu0 %v317
  %v385 = vpop.f32.mrb[0].mxu0
  %v386 = vadd.f32 0.0, %v385
  %v387 = vpop.f32.mrb[0].mxu0
  %388 = vdwg.mxu0
  %v389 = vlaneseq
  %v390 = vshrl.u32 %v389, 7
  %v391 = vsub.s32 0, %v390
  %v392 = vrot.slane %v386, %v391
  %v393 = vadd.f32 %v309, %v392
  %v394 = vld [vmem:[%s5] sm:$0x1]
  %v396 = vlaneseq
  %v397 = vshrl.u32 %v396, 7
  %v398 = vsub.s32 0, %v397
  %v399 = vrot.slane %v394, %v398
  %v401 = vadd.f32 %v393, %v399
  %v402 = vmax.f32 %v401, 0.0
  %v403 = vld [vmem:[%s6] sm:$0xff]
  %v404 = vld [vmem:[%s6 + $0x8] sm:$0xff]
  %v405 = vld [vmem:[%s6 + $0x10] sm:$0xff]
  %v406 = vld [vmem:[%s6 + $0x18] sm:$0xff]
  %v407 = vld [vmem:[%s7] sm:$0x1]
  %v409 = vlaneseq
  %v410 = vshrl.u32 %v409, 7
  %v411 = vsub.s32 0, %v410
  %v412 = vrot.slane %v407, %v411
  %v415 = vsel %vm73, %v402, 0
  %417 = vmatprep.subr.mxu0 0.0
  %418 = vmatpush1.msra.mxu0 %v403
  %419 = vmatprep.subr.mxu0 0.0
  %420 = vmatpush1.msra.mxu0 %v404
  %421 = vmatprep.subr.mxu0 0.0
  %422 = vmatpush1.msra.mxu0 %v405
  %423 = vmatprep.subr.mxu0 0.0
  %424 = vmatpush1.msra.mxu0 %v406
  %425 = vmatprep.subr.mxu0 0.0
  %426 = vmatpush1.msra.mxu0 0.0
  %427 = vmatprep.subr.mxu0 0.0
  %428 = vmatpush1.msra.mxu0 0.0
  %429 = vmatprep.subr.mxu0 0.0
  %430 = vmatpush1.msra.mxu0 0.0
  %431 = vmatprep.subr.mxu0 0.0
  %432 = vmatpush1.msra.mxu0 0.0
  %433 = vmatprep.subr.mxu0 0.0
  %434 = vmatpush1.msra.mxu0 0.0
  %435 = vmatprep.subr.mxu0 0.0
  %436 = vmatpush1.msra.mxu0 0.0
  %437 = vmatprep.subr.mxu0 0.0
  %438 = vmatpush1.msra.mxu0 0.0
  %439 = vmatprep.subr.mxu0 0.0
  %440 = vmatpush1.msra.mxu0 0.0
  %441 = vmatprep.subr.mxu0 0.0
  %442 = vmatpush1.msra.mxu0 0.0
  %443 = vmatprep.subr.mxu0 0.0
  %444 = vmatpush1.msra.mxu0 0.0
  %445 = vmatprep.subr.mxu0 0.0
  %446 = vmatpush1.msra.mxu0 0.0
  %447 = vmatprep.subr.mxu0 0.0
  %448 = vmatpush1.msra.mxu0 0.0
  %449 = vmatprep.subr.mxu0 0.0
  %450 = vmatpush1.msra.mxu0 0.0
  %451 = vmatprep.subr.mxu0 0.0
  %452 = vmatpush1.msra.mxu0 0.0
  %453 = vmatprep.subr.mxu0 0.0
  %454 = vmatpush1.msra.mxu0 0.0
  %455 = vmatprep.subr.mxu0 0.0
  %456 = vmatpush1.msra.mxu0 0.0
  %457 = vmatprep.subr.mxu0 0.0
  %458 = vmatpush1.msra.mxu0 0.0
  %459 = vmatprep.subr.mxu0 0.0
  %460 = vmatpush1.msra.mxu0 0.0
  %461 = vmatprep.subr.mxu0 0.0
  %462 = vmatpush1.msra.mxu0 0.0
  %463 = vmatprep.subr.mxu0 0.0
  %464 = vmatpush1.msra.mxu0 0.0
  %465 = vmatprep.subr.mxu0 0.0
  %466 = vmatpush1.msra.mxu0 0.0
  %467 = vmatprep.subr.mxu0 0.0
  %468 = vmatpush1.msra.mxu0 0.0
  %469 = vmatprep.subr.mxu0 0.0
  %470 = vmatpush1.msra.mxu0 0.0
  %471 = vmatprep.subr.mxu0 0.0
  %472 = vmatpush1.msra.mxu0 0.0
  %473 = vmatprep.subr.mxu0 0.0
  %474 = vmatpush1.msra.mxu0 0.0
  %475 = vmatprep.subr.mxu0 0.0
  %476 = vmatpush1.msra.mxu0 0.0
  %477 = vmatprep.subr.mxu0 0.0
  %478 = vmatpush1.msra.mxu0 0.0
  %479 = vmatprep.subr.mxu0 0.0
  %480 = vmatpush1.msra.mxu0 0.0
  %481 = vmatprep.mubr.f32.mxu0 0.0
  %482 = vmatmul.mubr.f32.gmra.mrb[0].mxu0 %v415
  %v483 = vpop.f32.mrb[0].mxu0
  %v484 = vadd.f32 %v412, %v483
  %v485 = vpop.f32.mrb[0].mxu0
  %486 = vdwg.mxu0
  %vm487 = vcmask 15360
  %v488 = vsel %vm487, %v484, -inf
  %489 = vmax.xlane.f32.xlu0 %v488
  %v490 = vpop.xlane.xlu0 %489
  %v491 = vsub.f32 %v484, %v490
  %v492 = vmul.f32 %v491, 1.442695
  %v493 = vpow.pop %v492
  %v494 = vsel %vm487, %v493, 0.0
  %495 = vadd.xlane.f32.xlu0 %v494
  %v496 = vpop.xlane.xlu0 %495
  %v497 = vrcp.pop %v496
  %v498 = vmul.f32 %v493, %v497
  %499 = vst [vmem:[%s8] sm:$0xff] 0.0
  %500 = vst.msk [vmem:[%s8] sm:$0xff] %vm73, %v146
  %501 = vrot.lane.b32.xlu0 %v152, 32
  %v502 = vpop.permute.xlu0 %501
  %vm504 = vcmask 523520
  %505 = vst.msk [vmem:[%s8] sm:$0xff] %vm504, %v502
  %506 = vrot.lane.b32.xlu0 %v153, 64
  %v507 = vpop.permute.xlu0 %506
  %vm509 = vcmask 785920
  %510 = vst.msk [vmem:[%s8] sm:$0xff] %vm509, %v507
  %512 = vrot.lane.b32.xlu0 %v498, 96
  %v513 = vpop.permute.xlu0 %512
  %vm515 = vcmask 802560
  %516 = vst.msk [vmem:[%s8] sm:$0xff] %vm515, %v513
  // Predicated region
  $region30: #{text_actor_forward.1} parent=0 // pred_check
    _
  $region31: #{text_actor_forward.1} parent=0 // pred_check_branch
    %518 = sbr.rel (0) target = $region33
  $region32: #{text_actor_forward.1} parent=0 // pred_region
    _
  $region33: #{text_actor_forward.1} parent=0 // pred_fallthru
    _
  // Predicated region
  $region34: #{text_actor_forward.1} parent=0 // pred_check
    _
  $region35: #{text_actor_forward.1} parent=0 // pred_check_branch
    %520 = sbr.rel (0) target = $region37
  $region36: #{text_actor_forward.1} parent=0 // pred_region
    _
  $region37: #{text_actor_forward.1} parent=0 // pred_fallthru
    _

</llo_original>
